<compile_context>
chip_gen: v7x
topology: tpu7x:2x2x1
jax: 0.10.0
libtpu: 0.0.40
codegen_flags: <defaults>
</compile_context>

<pallas_src>
import functools

import jax
import jax.numpy as jnp
from jax.experimental import pallas as pl
from jax.experimental.pallas import tpu as pltpu

EPS = 1e-5  # torch.nn.LayerNorm default


def _round_up(a, m):
    return (a + m - 1) // m * m


def _cdiv(a, b):
    return -(-a // b)


def _sublayer_connection_kernel(x_ref, gamma_ref, beta_ref, w_ref, b_ref, o_ref,
                                normed_ref, *, h_true):
    j = pl.program_id(1)
    tn = o_ref.shape[1]

    # ---- LayerNorm once per row tile (j == 0); stash result in VMEM scratch ----
    @pl.when(j == 0)
    def _():
        xf = x_ref[...].astype(jnp.float32)
        inv_h = jnp.float32(1.0 / h_true)
        # Padded hidden columns of x are zero, so plain sums are the true sums.
        mean = jnp.sum(xf, axis=-1, keepdims=True) * inv_h
        ex2 = jnp.sum(xf * xf, axis=-1, keepdims=True) * inv_h
        var = jnp.maximum(ex2 - mean * mean, 0.0)          # biased variance (torch LN)
        normed = (xf - mean) * jax.lax.rsqrt(var + EPS)
        # gamma/beta are zero on padded columns -> normed is zero there.
        normed = (normed * gamma_ref[...].astype(jnp.float32)
                  + beta_ref[...].astype(jnp.float32))
        normed_ref[...] = normed.astype(normed_ref.dtype)

    # ---- sublayer: Linear(H -> H) column block on the MXU, f32 accumulation ----
    sub = jnp.dot(normed_ref[...], w_ref[...], preferred_element_type=jnp.float32)
    sub = sub + b_ref[...].astype(jnp.float32)

    # ---- dropout (eval mode: identity) + residual ----
    # Re-read x from VMEM after the matmul to keep the f32 live range short.
    if tn == x_ref.shape[1]:
        x_res = x_ref[...].astype(jnp.float32)
    else:
        col0 = pl.multiple_of(j * tn, 128)
        x_res = x_ref[:, pl.ds(col0, tn)].astype(jnp.float32)
    o_ref[...] = (x_res + sub).astype(o_ref.dtype)


def sublayer_connection(x, gamma, beta, w, b, *, tm=None):
    """x: [B, S, H]; gamma/beta: [H]; w: [H, H]; b: [H]. Eval-mode dropout."""
    B, S, H = x.shape
    R = B * S

    x_bytes = jnp.dtype(x.dtype).itemsize
    w_bytes = jnp.dtype(w.dtype).itemsize
    p_bytes = jnp.dtype(gamma.dtype).itemsize

    # Generation-aware VMEM budget (v7x: 64 MiB/TC, v5e/v6e: 128 MiB).
    try:
        vmem_cap = int(pltpu.get_tpu_info().vmem_capacity_bytes)
    except Exception:
        vmem_cap = 64 * 1024 * 1024  # conservative fallback (valid everywhere)
    vmem_budget = int(vmem_cap * 0.9)

    # Lane-dense hidden axis.
    Hp = _round_up(H, 128)

    # Weight layout: fully resident single-buffered if it fits ~half the budget,
    # otherwise tile output columns (double-buffered column blocks).
    if Hp * Hp * w_bytes <= vmem_budget // 2:
        tn, nt = Hp, 1
    else:
        tn = 128
        for cand in (2048, 1024, 512, 256):
            if Hp % cand == 0 and 2 * Hp * cand * w_bytes <= vmem_budget // 3:
                tn = cand
                break
        nt = Hp // tn

    # Row tile: 512 on 128-MiB-VMEM parts (v5e/v6e), 256 on v7x; clamp for tiny inputs.
    if tm is None:
        tm = 512 if vmem_cap >= 96 * 1024 * 1024 else 256
    row_pack = 16 if x_bytes == 2 else 8            # bf16/f16 sublane packing
    tm_eff = min(_round_up(tm, row_pack), _round_up(R, row_pack))
    # Keep >= 2 row blocks when possible so v7x megacore has work on both cores.
    if _cdiv(R, tm_eff) == 1 and R >= 2 * row_pack:
        tm_eff = _round_up(_cdiv(R, 2), row_pack)

    def vmem_need(tm_):
        w_bufs = 1 if nt == 1 else 2
        return (2 * tm_ * Hp * x_bytes              # x tiles (double-buffered)
                + 2 * tm_ * tn * x_bytes            # out tiles (double-buffered)
                + w_bufs * Hp * tn * w_bytes        # weight block(s)
                + 2 * Hp * p_bytes                  # gamma, beta (single-buffered)
                + 2 * tn * p_bytes                  # bias
                + tm_ * Hp * w_bytes                # normed scratch
                + 4 * tm_ * Hp * 4)                 # f32 temporaries headroom

    while vmem_need(tm_eff) > vmem_budget and tm_eff > row_pack:
        tm_eff = max(row_pack, _round_up(tm_eff // 2, row_pack))

    vmem_limit = int(min(vmem_budget,
                         max(32 * 1024 * 1024, vmem_need(tm_eff) + (4 << 20))))

    # Only hidden-axis padding (zeros), never row padding / output row slicing.
    x2 = x.reshape(R, H)
    if Hp != H:
        x2 = jnp.pad(x2, ((0, 0), (0, Hp - H)))
        gamma2 = jnp.pad(gamma, (0, Hp - H)).reshape(1, Hp)
        beta2 = jnp.pad(beta, (0, Hp - H)).reshape(1, Hp)
        b2 = jnp.pad(b, (0, Hp - H)).reshape(1, Hp)
        w2 = jnp.pad(w, ((0, Hp - H), (0, Hp - H)))
    else:
        gamma2 = gamma.reshape(1, Hp)
        beta2 = beta.reshape(1, Hp)
        b2 = b.reshape(1, Hp)
        w2 = w

    const2d = lambda i, j: (0, 0)
    if nt == 1:
        w_spec = pl.BlockSpec((Hp, Hp), const2d, pipeline_mode=pl.Buffered(1))
        b_spec = pl.BlockSpec((1, Hp), const2d, pipeline_mode=pl.Buffered(1))
    else:
        w_spec = pl.BlockSpec((Hp, tn), lambda i, j: (0, j))
        b_spec = pl.BlockSpec((1, tn), lambda i, j: (0, j))

    grid = (_cdiv(R, tm_eff), nt)

    cost = pl.CostEstimate(
        flops=2 * R * Hp * Hp + 10 * R * Hp,
        transcendentals=R,
        bytes_accessed=2 * R * Hp * x_bytes + Hp * Hp * w_bytes + 4 * Hp * p_bytes,
    )

    grid_spec = pltpu.PrefetchScalarGridSpec(
        num_scalar_prefetch=0,
        grid=grid,
        in_specs=[
            pl.BlockSpec((tm_eff, Hp), lambda i, j: (i, 0)),                   # x row-tile
            pl.BlockSpec((1, Hp), const2d, pipeline_mode=pl.Buffered(1)),      # gamma
            pl.BlockSpec((1, Hp), const2d, pipeline_mode=pl.Buffered(1)),      # beta
            w_spec,                                                            # sublayer weight
            b_spec,                                                            # sublayer bias
        ],
        out_specs=pl.BlockSpec((tm_eff, tn), lambda i, j: (i, j)),
        scratch_shapes=[pltpu.VMEM((tm_eff, Hp), w.dtype)],                    # normed rows
    )

    out2 = pl.pallas_call(
        functools.partial(_sublayer_connection_kernel, h_true=H),
        out_shape=jax.ShapeDtypeStruct((R, Hp), x.dtype),
        grid_spec=grid_spec,
        compiler_params=pltpu.CompilerParams(
            dimension_semantics=("parallel", "arbitrary"),
            vmem_limit_bytes=vmem_limit,
        ),
        cost_estimate=cost,
    )(x2, gamma2, beta2, w2, b2)

    if Hp != H:
        out2 = out2[:, :H]
    return out2.reshape(B, S, H)


def _reference(x, gamma, beta, w, b):
    xf = x.astype(jnp.float32)
    mean = jnp.mean(xf, axis=-1, keepdims=True)
    var = jnp.mean((xf - mean) ** 2, axis=-1, keepdims=True)
    normed = (xf - mean) * jax.lax.rsqrt(var + EPS) * gamma.astype(jnp.float32) \
        + beta.astype(jnp.float32)
    sub = jnp.einsum("bsh,hk->bsk", normed, w.astype(jnp.float32)) \
        + b.astype(jnp.float32)
    return xf + sub


if __name__ == "__main__":
    B, S, H = 2, 8, 32
    key = jax.random.PRNGKey(0)
    kx, kg, kb, kw, kbias = jax.random.split(key, 5)

    x = jax.random.normal(kx, (B, S, H), dtype=jnp.float32)
    # LayerNorm params (torch init: gamma=1, beta=0; perturb slightly, deterministically)
    gamma = jnp.ones((H,), jnp.float32) + 0.01 * jax.random.normal(kg, (H,), jnp.float32)
    beta = 0.01 * jax.random.normal(kb, (H,), jnp.float32)
    # Example sublayer: Linear(H, H)
    w = jax.random.normal(kw, (H, H), jnp.float32) * (1.0 / jnp.sqrt(H))
    b = 0.01 * jax.random.normal(kbias, (H,), jnp.float32)

    # f32 path (tight tolerance vs f32 reference)
    out = sublayer_connection(x, gamma, beta, w, b)
    out = jax.block_until_ready(out)
    ref = _reference(x, gamma, beta, w, b)
    assert out.shape == (B, S, H)
    assert jnp.allclose(out.astype(jnp.float32), ref, atol=1e-4, rtol=1e-4), \
        "f32 mismatch vs reference"

    # bf16 end-to-end path (bf16 MXU operands, f32 accumulation; loose tolerance)
    xb = x.astype(jnp.bfloat16)
    wb = w.astype(jnp.bfloat16)
    outb = sublayer_connection(xb, gamma, beta, wb, b)
    outb = jax.block_until_ready(outb)
    assert outb.dtype == jnp.bfloat16
    refb = _reference(xb.astype(jnp.float32), gamma, beta, wb.astype(jnp.float32), b)
    assert jnp.allclose(outb.astype(jnp.float32), refb, atol=5e-2, rtol=5e-2), \
        "bf16 mismatch vs reference"

    print("KERNEL_OK")
</pallas_src>

<mosaic_0001>
module attributes {stable_mosaic.version = 11 : i64} {
  func.func @_sublayer_connection_kernel(%arg0: i32, %arg1: i32, %arg2: memref<8x128xf32, #tpu.memory_space<vmem>>, %arg3: memref<1x128xf32, #tpu.memory_space<vmem>>, %arg4: memref<1x128xf32, #tpu.memory_space<vmem>>, %arg5: memref<128x128xf32, #tpu.memory_space<vmem>>, %arg6: memref<1x128xf32, #tpu.memory_space<vmem>>, %arg7: memref<8x128xf32, #tpu.memory_space<vmem>>, %arg8: memref<8x128xf32, #tpu.memory_space<vmem>>) attributes {dimension_semantics = [#tpu.dimension_semantics<parallel>, #tpu.dimension_semantics<arbitrary>], iteration_bounds = array<i64: 2, 1>, scalar_prefetch = 0 : i64, scratch_operands = 1 : i64, tpu.core_type = #tpu.core_type<tc>, window_params = [{transform_indices = @transform_0, window_bounds = array<i64: 8, 128>}, {pipeline_mode = #tpu.pipeline_mode<synchronous>, transform_indices = @transform_1, window_bounds = array<i64: 1, 128>}, {pipeline_mode = #tpu.pipeline_mode<synchronous>, transform_indices = @transform_2, window_bounds = array<i64: 1, 128>}, {pipeline_mode = #tpu.pipeline_mode<synchronous>, transform_indices = @transform_3, window_bounds = array<i64: 128, 128>}, {pipeline_mode = #tpu.pipeline_mode<synchronous>, transform_indices = @transform_4, window_bounds = array<i64: 1, 128>}, {transform_indices = @transform_5, window_bounds = array<i64: 8, 128>}]} {
    %c0_i32 = arith.constant 0 : i32
    %0 = arith.cmpi eq, %arg1, %c0_i32 : i32
    %1 = arith.extui %0 : i1 to i32
    %c0_i32_0 = arith.constant 0 : i32
    %2 = arith.cmpi ne, %1, %c0_i32_0 : i32
    scf.if %2 {
      %c0_10 = arith.constant 0 : index
      %c0_11 = arith.constant 0 : index
      %12 = vector.load %arg2[%c0_10, %c0_11] : memref<8x128xf32, #tpu.memory_space<vmem>>, vector<8x128xf32>
      %cst_12 = arith.constant dense<0.000000e+00> : vector<8xf32>
      %13 = vector.multi_reduction <add>, %12, %cst_12 [1] : vector<8x128xf32> to vector<8xf32>
      %14 = vector.shape_cast %13 : vector<8xf32> to vector<8x1xf32>
      %cst_13 = arith.constant 3.125000e-02 : f32
      %15 = vector.broadcast %cst_13 : f32 to vector<8x1xf32>
      %16 = arith.mulf %14, %15 : vector<8x1xf32>
      %17 = arith.mulf %12, %12 : vector<8x128xf32>
      %cst_14 = arith.constant dense<0.000000e+00> : vector<8xf32>
      %18 = vector.multi_reduction <add>, %17, %cst_14 [1] : vector<8x128xf32> to vector<8xf32>
      %19 = vector.shape_cast %18 : vector<8xf32> to vector<8x1xf32>
      %cst_15 = arith.constant 3.125000e-02 : f32
      %20 = vector.broadcast %cst_15 : f32 to vector<8x1xf32>
      %21 = arith.mulf %19, %20 : vector<8x1xf32>
      %22 = arith.mulf %16, %16 : vector<8x1xf32>
      %23 = arith.subf %21, %22 : vector<8x1xf32>
      %cst_16 = arith.constant 0.000000e+00 : f32
      %24 = vector.broadcast %cst_16 : f32 to vector<8x1xf32>
      %25 = arith.maximumf %23, %24 : vector<8x1xf32>
      %26 = vector.broadcast %16 : vector<8x1xf32> to vector<8x128xf32>
      %27 = arith.subf %12, %26 : vector<8x128xf32>
      %cst_17 = arith.constant 9.99999974E-6 : f32
      %28 = vector.broadcast %cst_17 : f32 to vector<8x1xf32>
      %29 = arith.addf %25, %28 : vector<8x1xf32>
      %30 = math.rsqrt %29 : vector<8x1xf32>
      %31 = vector.broadcast %30 : vector<8x1xf32> to vector<8x128xf32>
      %32 = arith.mulf %27, %31 : vector<8x128xf32>
      %c0_18 = arith.constant 0 : index
      %c0_19 = arith.constant 0 : index
      %33 = vector.load %arg3[%c0_18, %c0_19] : memref<1x128xf32, #tpu.memory_space<vmem>>, vector<1x128xf32>
      %34 = vector.broadcast %33 : vector<1x128xf32> to vector<8x128xf32>
      %35 = arith.mulf %32, %34 : vector<8x128xf32>
      %c0_20 = arith.constant 0 : index
      %c0_21 = arith.constant 0 : index
      %36 = vector.load %arg4[%c0_20, %c0_21] : memref<1x128xf32, #tpu.memory_space<vmem>>, vector<1x128xf32>
      %37 = vector.broadcast %36 : vector<1x128xf32> to vector<8x128xf32>
      %38 = arith.addf %35, %37 : vector<8x128xf32>
      %c0_22 = arith.constant 0 : index
      %c0_23 = arith.constant 0 : index
      %39 = vector.load %arg8[%c0_22, %c0_23] : memref<8x128xf32, #tpu.memory_space<vmem>>, vector<8x128xf32>
      tpu.vector_store %arg8[%c0_22, %c0_23], %38 {strides = array<i32>} : memref<8x128xf32, #tpu.memory_space<vmem>>, vector<8x128xf32>,
    } else {
    }
    %c0 = arith.constant 0 : index
    %c0_1 = arith.constant 0 : index
    %3 = vector.load %arg8[%c0, %c0_1] : memref<8x128xf32, #tpu.memory_space<vmem>>, vector<8x128xf32>
    %c0_2 = arith.constant 0 : index
    %c0_3 = arith.constant 0 : index
    %4 = vector.load %arg5[%c0_2, %c0_3] : memref<128x128xf32, #tpu.memory_space<vmem>>, vector<128x128xf32>
    %cst = arith.constant dense<0.000000e+00> : vector<8x128xf32>
    %5 = tpu.matmul %3, %4, %cst {dimension_numbers = #tpu.dot_dimension_numbers<[1], [0], [0], [1], [0, 0, 1, 1], [], []>} : vector<8x128xf32>, vector<128x128xf32>, vector<8x128xf32> -> vector<8x128xf32>
    %c0_4 = arith.constant 0 : index
    %c0_5 = arith.constant 0 : index
    %6 = vector.load %arg6[%c0_4, %c0_5] : memref<1x128xf32, #tpu.memory_space<vmem>>, vector<1x128xf32>
    %7 = vector.broadcast %6 : vector<1x128xf32> to vector<8x128xf32>
    %8 = arith.addf %5, %7 : vector<8x128xf32>
    %c0_6 = arith.constant 0 : index
    %c0_7 = arith.constant 0 : index
    %9 = vector.load %arg2[%c0_6, %c0_7] : memref<8x128xf32, #tpu.memory_space<vmem>>, vector<8x128xf32>
    %10 = arith.addf %9, %8 : vector<8x128xf32>
    %c0_8 = arith.constant 0 : index
    %c0_9 = arith.constant 0 : index
    %11 = vector.load %arg7[%c0_8, %c0_9] : memref<8x128xf32, #tpu.memory_space<vmem>>, vector<8x128xf32>
    tpu.vector_store %arg7[%c0_8, %c0_9], %10 {strides = array<i32>} : memref<8x128xf32, #tpu.memory_space<vmem>>, vector<8x128xf32>,
    return
  }
  func.func @transform_0(%arg0: i32, %arg1: i32) -> (i32, i32) {
    %c0_i32 = arith.constant 0 : i32
    %c0_i32_0 = arith.constant 0 : i32
    return %arg0, %c0_i32 : i32, i32
  }
  func.func @transform_1(%arg0: i32, %arg1: i32) -> (i32, i32) {
    %c0_i32 = arith.constant 0 : i32
    %c0_i32_0 = arith.constant 0 : i32
    %c0_i32_1 = arith.constant 0 : i32
    return %c0_i32, %c0_i32_0 : i32, i32
  }
  func.func @transform_2(%arg0: i32, %arg1: i32) -> (i32, i32) {
    %c0_i32 = arith.constant 0 : i32
    %c0_i32_0 = arith.constant 0 : i32
    %c0_i32_1 = arith.constant 0 : i32
    return %c0_i32, %c0_i32_0 : i32, i32
  }
  func.func @transform_3(%arg0: i32, %arg1: i32) -> (i32, i32) {
    %c0_i32 = arith.constant 0 : i32
    %c0_i32_0 = arith.constant 0 : i32
    %c0_i32_1 = arith.constant 0 : i32
    return %c0_i32, %c0_i32_0 : i32, i32
  }
  func.func @transform_4(%arg0: i32, %arg1: i32) -> (i32, i32) {
    %c0_i32 = arith.constant 0 : i32
    %c0_i32_0 = arith.constant 0 : i32
    %c0_i32_1 = arith.constant 0 : i32
    return %c0_i32, %c0_i32_0 : i32, i32
  }
  func.func @transform_5(%arg0: i32, %arg1: i32) -> (i32, i32) {
    %c0_i32 = arith.constant 0 : i32
    return %arg0, %arg1 : i32, i32
  }
}

</mosaic_0001>

<llo_original>
// kernel: tpu_custom_call.1
$region0: #{tpu_custom_call.1}
  #allocation0 [shape = 'u32[]', space=smem, size = 0x4, offset = 0x4, fixed_abs, tag = 'smem constant byte address 0x4 - core index']
  #allocation1 [shape = 'u32[144,128]{1,0:T(1,128)}', space=vmem, size = 0x12000, scoped, tag = 'internal scratch']
  #allocation2 [shape = 'f32[8,128]{1,0:T(8,128)}', space=vmem, size = 0x1000, scoped, tag = 'scratch operand']
  %s0 = inlined_call_operand.hbm [shape: f32[16,128], index: 0, kind: input, shape index: {}]
  %s1 = inlined_call_operand.vmem [shape: f32[1,128], index: 1, kind: input, shape index: {}]
  %s2 = inlined_call_operand.vmem [shape: f32[1,128], index: 2, kind: input, shape index: {}]
  %s3 = inlined_call_operand.hbm [shape: f32[128,128], index: 3, kind: input, shape index: {}]
  %s4 = inlined_call_operand.vmem [shape: f32[1,128], index: 4, kind: input, shape index: {}]
  %s5 = inlined_call_operand.hbm [shape: f32[16,128], index: 5, kind: output, shape index: {}]
  %s6 = sld [smem:[#allocation0]]
  $region65: #{tpu_custom_call.1} parent=0
    _
  %s8 = ssub.s32 1, %s6
  %s9 = scalar_select 0, %s8, %s6
  $region1: #{tpu_custom_call.1} parent=0
    #allocation3 [shape = 'u8[8192]{0}', space=vmem, size = 0x2000, scoped, tag = 'input window, operand 0']
    #allocation4 [shape = 's32[2]{0}', space=sflag, size = 0x8, scoped, tag = 'scoped memory for tpu_custom_call.1']
    #allocation5 [shape = 's32[2]{0}', space=sflag, size = 0x8, scoped, tag = 'scoped memory for tpu_custom_call.1']
    #allocation6 [shape = 'u8[65536]{0}', space=vmem, size = 0x10000, scoped, tag = 'input window, operand 3, single buffered']
    #allocation7 [shape = 's32[1]{0}', space=sflag, size = 0x4, scoped, tag = 'scoped memory for tpu_custom_call.1']
    #allocation8 [shape = 'u8[8192]{0}', space=vmem, size = 0x2000, scoped, tag = 'output window, operand 0']
    %10 = vsyncpa [#allocation4], 0
    %s11 = scalar_lea.sflag [#allocation4], 1
    %12 = vsyncpa %s11, 0
    %13 = vsyncpa [#allocation7], 0
    %14 = vsyncpa [#allocation5], 0
    %s15 = scalar_lea.sflag [#allocation5], 1
    %16 = vsyncpa %s15, 0
    loop: start=0, step=1, limit=4
    $region2: #{tpu_custom_call.1} parent=1 // loop_pre_header
      _
    $region3: #{tpu_custom_call.1} parent=1 // loop_header
      %s18 = sphi 0, %s22
      %p19 = scmp.ge.s32.totalorder %s18, 4
      %s25 = sphi 0, %s37
      %s26 = sphi 0, %s33
      %s27 = sphi 0, %s25
      %s28 = sphi 0, %s26
      %s29 = sphi 0, %s27
      %s30 = sphi 0, %s28
      %s40 = sphi 0, %s42
      %s43 = sphi 0, %s40
      %s44 = sphi 0, %s43
      %s60 = sphi 0, %s44
      %s64 = sphi 0, %s64
      %s66 = sphi 0, %s64
      %s67 = sphi 0, %s66
      %s81 = sphi 0, %s67
      %s85 = sphi 0, %s85
      %s87 = sphi 0, %s85
      %s88 = sphi 0, %s87
      %s102 = sphi 0, %s88
      %s106 = sphi 0, %s106
      %s108 = sphi 0, %s106
      %s109 = sphi 0, %s108
      %s123 = sphi 0, %s109
      %s127 = sphi 0, %s127
      %s129 = sphi 0, %s127
      %s130 = sphi 0, %s129
      %s144 = sphi 0, %s130
      %s152 = sphi 0, %s154
      %s155 = sphi 0, %s152
      %s156 = sphi 0, %s155
      %s172 = sphi 0, %s156
    $region4: #{tpu_custom_call.1} parent=1 // loop_header_branch
      %21 = sbr.rel (%p19) target = $region8
    $region5: #{tpu_custom_call.1} parent=1 // loop_body
      %s23 = ssub.s32 %s18, 1
      %s24 = ssub.s32 %s18, 2
      %s31 = sadd.s32 1, %s26
      %p32 = scmp.ge.s32.totalorder %s31, 1
      %s33 = scalar_select %p32, 0, %s31
      %s34 = sadd.s32 1, %s25
      %s35 = scalar_select %p32, %s34, %s25
      %p36 = scmp.ge.s32.totalorder %s35, 2
      %s37 = scalar_select %p36, 0, %s35
      %s38 = ssub.s32 %s25, %s37
      %p39 = scmp.eq.s32.totalorder %s38, 0
      %s41 = sadd.s32 %s40, 1
      %s42 = scalar_select %p39, %s40, %s41
      %p45 = pneg %p39
      %p46 = scmp.eq.s32.totalorder %s18, 1
      %p47 = por %p45, %p46
      %p48 = scmp.ne.s32.totalorder %s40, %s43
      %p49 = scmp.eq.s32.totalorder %s18, 0
      %p50 = por %p48, %p49
      %p51 = scmp.ne.s32.totalorder %s40, %s43
      %p52 = scmp.eq.s32.totalorder %s23, 1
      %p53 = por %p51, %p52
      %p54 = scmp.ne.s32.totalorder %s43, %s44
      %p55 = scmp.eq.s32.totalorder %s23, 0
      %p56 = por %p54, %p55
      %p57 = scmp.ne.s32.totalorder %s43, %s44
      %p58 = scmp.eq.s32.totalorder %s24, 1
      %p59 = por %p57, %p58
      %p61 = scmp.ne.s32.totalorder %s44, %s60
      %p62 = scmp.eq.s32.totalorder %s24, 0
      %p63 = por %p61, %p62
      %s65 = sadd.s32 %s64, 1
      %p68 = scmp.eq.s32.totalorder %s18, 1
      %p69 = scmp.ne.s32.totalorder %s64, %s66
      %p70 = scmp.eq.s32.totalorder %s18, 0
      %p71 = por %p69, %p70
      %p72 = scmp.ne.s32.totalorder %s64, %s66
      %p73 = scmp.eq.s32.totalorder %s23, 1
      %p74 = por %p72, %p73
      %p75 = scmp.ne.s32.totalorder %s66, %s67
      %p76 = scmp.eq.s32.totalorder %s23, 0
      %p77 = por %p75, %p76
      %p78 = scmp.ne.s32.totalorder %s66, %s67
      %p79 = scmp.eq.s32.totalorder %s24, 1
      %p80 = por %p78, %p79
      %p82 = scmp.ne.s32.totalorder %s67, %s81
      %p83 = scmp.eq.s32.totalorder %s24, 0
      %p84 = por %p82, %p83
      %s86 = sadd.s32 %s85, 1
      %p89 = scmp.eq.s32.totalorder %s18, 1
      %p90 = scmp.ne.s32.totalorder %s85, %s87
      %p91 = scmp.eq.s32.totalorder %s18, 0
      %p92 = por %p90, %p91
      %p93 = scmp.ne.s32.totalorder %s85, %s87
      %p94 = scmp.eq.s32.totalorder %s23, 1
      %p95 = por %p93, %p94
      %p96 = scmp.ne.s32.totalorder %s87, %s88
      %p97 = scmp.eq.s32.totalorder %s23, 0
      %p98 = por %p96, %p97
      %p99 = scmp.ne.s32.totalorder %s87, %s88
      %p100 = scmp.eq.s32.totalorder %s24, 1
      %p101 = por %p99, %p100
      %p103 = scmp.ne.s32.totalorder %s88, %s102
      %p104 = scmp.eq.s32.totalorder %s24, 0
      %p105 = por %p103, %p104
      %s107 = sadd.s32 %s106, 1
      %p110 = scmp.eq.s32.totalorder %s18, 1
      %p111 = scmp.ne.s32.totalorder %s106, %s108
      %p112 = scmp.eq.s32.totalorder %s18, 0
      %p113 = por %p111, %p112
      %p114 = scmp.ne.s32.totalorder %s106, %s108
      %p115 = scmp.eq.s32.totalorder %s23, 1
      %p116 = por %p114, %p115
      %p117 = scmp.ne.s32.totalorder %s108, %s109
      %p118 = scmp.eq.s32.totalorder %s23, 0
      %p119 = por %p117, %p118
      %p120 = scmp.ne.s32.totalorder %s108, %s109
      %p121 = scmp.eq.s32.totalorder %s24, 1
      %p122 = por %p120, %p121
      %p124 = scmp.ne.s32.totalorder %s109, %s123
      %p125 = scmp.eq.s32.totalorder %s24, 0
      %p126 = por %p124, %p125
      %s128 = sadd.s32 %s127, 1
      %p131 = scmp.eq.s32.totalorder %s18, 1
      %p132 = scmp.ne.s32.totalorder %s127, %s129
      %p133 = scmp.eq.s32.totalorder %s18, 0
      %p134 = por %p132, %p133
      %p135 = scmp.ne.s32.totalorder %s127, %s129
      %p136 = scmp.eq.s32.totalorder %s23, 1
      %p137 = por %p135, %p136
      %p138 = scmp.ne.s32.totalorder %s129, %s130
      %p139 = scmp.eq.s32.totalorder %s23, 0
      %p140 = por %p138, %p139
      %p141 = scmp.ne.s32.totalorder %s129, %s130
      %p142 = scmp.eq.s32.totalorder %s24, 1
      %p143 = por %p141, %p142
      %p145 = scmp.ne.s32.totalorder %s130, %s144
      %p146 = scmp.eq.s32.totalorder %s24, 0
      %p147 = por %p145, %p146
      %s148 = ssub.s32 %s25, %s37
      %s149 = ssub.s32 %s26, %s33
      %s150 = sor.u32 %s148, %s149
      %p151 = scmp.eq.s32.totalorder %s150, 0
      %s153 = sadd.s32 %s152, 1
      %s154 = scalar_select %p151, %s152, %s153
      %p157 = pneg %p151
      %p158 = scmp.eq.s32.totalorder %s18, 1
      %p159 = por %p157, %p158
      %p160 = scmp.ne.s32.totalorder %s152, %s155
      %p161 = scmp.eq.s32.totalorder %s18, 0
      %p162 = por %p160, %p161
      %p163 = scmp.ne.s32.totalorder %s152, %s155
      %p164 = scmp.eq.s32.totalorder %s23, 1
      %p165 = por %p163, %p164
      %p166 = scmp.ne.s32.totalorder %s155, %s156
      %p167 = scmp.eq.s32.totalorder %s23, 0
      %p168 = por %p166, %p167
      %p169 = scmp.ne.s32.totalorder %s155, %s156
      %p170 = scmp.eq.s32.totalorder %s24, 1
      %p171 = por %p169, %p170
      %p173 = scmp.ne.s32.totalorder %s156, %s172
      %p174 = scmp.eq.s32.totalorder %s24, 0
      %p175 = por %p173, %p174
      %p176 = scmp.le.s32.totalorder 1, %s18
      %p177 = scmp.lt.s32.totalorder %s18, 3
      %p178 = pnand %p176, %p177
      %p179 = pneg %p178
      // Predicated region
      $region9: #{tpu_custom_call.1} parent=5 // pred_check
        _
      $region10: #{tpu_custom_call.1} parent=5 // pred_check_branch
        %181 = sbr.rel (%p178) target = $region12
      $region11: #{tpu_custom_call.1} parent=5 // pred_region
        %s182 = ssub.s32 %s18, 1
        // Predicated region
        $region13: #{tpu_custom_call.1} parent=11 // pred_check
          %p183 = pneg %p77
        $region14: #{tpu_custom_call.1} parent=11 // pred_check_branch
          %185 = sbr.rel (%p183) target = $region16
        $region15: #{tpu_custom_call.1} parent=11 // pred_region
          _
        $region16: #{tpu_custom_call.1} parent=11 // pred_fallthru
          _
        // Predicated region
        $region17: #{tpu_custom_call.1} parent=11 // pred_check
          %p186 = pneg %p98
        $region18: #{tpu_custom_call.1} parent=11 // pred_check_branch
          %188 = sbr.rel (%p186) target = $region20
        $region19: #{tpu_custom_call.1} parent=11 // pred_region
          _
        $region20: #{tpu_custom_call.1} parent=11 // pred_fallthru
          _
        // Predicated region
        $region21: #{tpu_custom_call.1} parent=11 // pred_check
          %p189 = pneg %p119
        $region22: #{tpu_custom_call.1} parent=11 // pred_check_branch
          %191 = sbr.rel (%p189) target = $region24
        $region23: #{tpu_custom_call.1} parent=11 // pred_region
          %s193 = ssub.s32 2048, 2048
          %194 = vsyncadd [#allocation7], %s193
          %s195 = sshll.u32 [#allocation6], 4
          %s196 = int_to_ptr.vmem [resolvable:$true] %s195
          %201 = dma.hbm_to_vmem [thread:$0]  %s3, 2048, %s196, [#allocation7], 128, 128, 8
        $region24: #{tpu_custom_call.1} parent=11 // pred_fallthru
          _
        // Predicated region
        $region25: #{tpu_custom_call.1} parent=11 // pred_check
          %p202 = pneg %p140
        $region26: #{tpu_custom_call.1} parent=11 // pred_check_branch
          %204 = sbr.rel (%p202) target = $region28
        $region27: #{tpu_custom_call.1} parent=11 // pred_region
          _
        $region28: #{tpu_custom_call.1} parent=11 // pred_fallthru
          _
      $region12: #{tpu_custom_call.1} parent=5 // pred_fallthru
        _
      %p205 = scmp.lt.s32.totalorder %s18, 2
      // Predicated region
      $region29: #{tpu_custom_call.1} parent=5 // pred_check
        %p206 = pneg %p205
      $region30: #{tpu_custom_call.1} parent=5 // pred_check_branch
        %208 = sbr.rel (%p206) target = $region32
      $region31: #{tpu_custom_call.1} parent=5 // pred_region
        // Predicated region
        $region33: #{tpu_custom_call.1} parent=31 // pred_check
          %p209 = pneg %p50
        $region34: #{tpu_custom_call.1} parent=31 // pred_check_branch
          %211 = sbr.rel (%p209) target = $region36
        $region35: #{tpu_custom_call.1} parent=31 // pred_region
          %s212 = sand.u32 %s40, 1
          %s213 = scalar_lea.sflag [#allocation4], %s212
          %s214 = sand.u32 %s40, 1
          %s215 = smul.addr %s214, 8
          %s216 = scalar_lea.vmem [#allocation3], %s215
          %s218 = ssub.s32 128, 128
          %219 = vsyncadd %s213, %s218
          %s220 = smul.addr %s25, 128
          %s221 = scalar_lea.hbm %s0, %s220
          %s223 = sshll.u32 %s216, 4
          %s224 = int_to_ptr.vmem [resolvable:$true] %s223
          %226 = dma.hbm_to_vmem [thread:$0]  %s221, 128, %s224, %s213
        $region36: #{tpu_custom_call.1} parent=31 // pred_fallthru
          _
      $region32: #{tpu_custom_call.1} parent=5 // pred_fallthru
        _
      %p227 = scmp.le.s32.totalorder 1, %s18
      %p228 = scmp.lt.s32.totalorder %s18, 3
      %p229 = pnand %p227, %p228
      %p230 = pneg %p229
      // Predicated region
      $region37: #{tpu_custom_call.1} parent=5 // pred_check
        _
      $region38: #{tpu_custom_call.1} parent=5 // pred_check_branch
        %232 = sbr.rel (%p229) target = $region40
      $region39: #{tpu_custom_call.1} parent=5 // pred_region
        %s233 = ssub.s32 %s18, 1
        %s234 = sand.u32 %s43, 1
        %s235 = scalar_lea.sflag [#allocation4], %s234
        %s236 = sand.u32 %s43, 1
        %s237 = smul.addr %s236, 8
        %s238 = scalar_lea.vmem [#allocation3], %s237
        // Predicated region
        $region41: #{tpu_custom_call.1} parent=39 // pred_check
          %p239 = pneg %p56
        $region42: #{tpu_custom_call.1} parent=39 // pred_check_branch
          %241 = sbr.rel (%p239) target = $region44
        $region43: #{tpu_custom_call.1} parent=39 // pred_region
          %242 = dma.done %s235, 128
        $region44: #{tpu_custom_call.1} parent=39 // pred_fallthru
          _
        // Predicated region
        $region45: #{tpu_custom_call.1} parent=39 // pred_check
          %p243 = pneg %p119
        $region46: #{tpu_custom_call.1} parent=39 // pred_check_branch
          %245 = sbr.rel (%p243) target = $region48
        $region47: #{tpu_custom_call.1} parent=39 // pred_region
          %246 = dma.done [#allocation7], 2048
        $region48: #{tpu_custom_call.1} parent=39 // pred_fallthru
          _
        %s247 = sand.u32 %s43, 1
        %s248 = scalar_lea.sflag [#allocation4], %s247
        %s249 = sand.u32 %s43, 1
        %s250 = smul.addr %s249, 8
        %s251 = scalar_lea.vmem [#allocation3], %s250
        %p252 = pneg %p56
        %p253 = pneg %p53
        %p254 = pneg %p77
        %p255 = pneg %p74
        %p256 = pneg %p98
        %p257 = pneg %p95
        %p258 = pneg %p119
        %p259 = pneg %p116
        %p260 = pneg %p140
        %p261 = pneg %p137
        %p262 = pneg %p168
        %p263 = pneg %p165
        %s264 = sand.u32 %s155, 1
        %s265 = scalar_lea.sflag [#allocation5], %s264
        %s266 = sand.u32 %s155, 1
        %s267 = smul.addr %s266, 8
        %s268 = scalar_lea.vmem [#allocation8], %s267
        %p269 = scmp.eq.s32.totalorder %s28, 0
        // Predicated region
        $region49: #{tpu_custom_call.1} parent=39 // pred_check
          %p270 = pneg %p269
        $region50: #{tpu_custom_call.1} parent=39 // pred_check_branch
          %272 = sbr.rel (%p270) target = $region52
        $region51: #{tpu_custom_call.1} parent=39 // pred_region
          %v273 = vld [vmem:[%s238] sm:$0xff]
          %274 = vadd.xlane.f32.xlu0 %v273
          %v275 = vpop.xlane.xlu0 %274
          %v276 = vmul.f32 %v275, 0.03125
          %v277 = vmul.f32 %v273, %v273
          %278 = vadd.xlane.f32.xlu0 %v277
          %v279 = vpop.xlane.xlu0 %278
          %v280 = vmul.f32 %v279, 0.03125
          %v281 = vmul.f32 %v276, %v276
          %v282 = vsub.f32 %v280, %v281
          %v283 = vmax.f32 %v282, 0.0
          %v284 = vsub.f32 %v273, %v276
          %v285 = vadd.f32 %v283, 1e-05
          %v286 = vrsqrt.pop %v285
          %v287 = vmul.f32 %v284, %v286
          %v288 = vld [vmem:[%s1] sm:$0x1]
          %v290 = vlaneseq
          %v291 = vshrl.u32 %v290, 7
          %v292 = vsub.s32 0, %v291
          %v293 = vrot.slane %v288, %v292
          %v295 = vmul.f32 %v287, %v293
          %v296 = vld [vmem:[%s2] sm:$0x1]
          %v298 = vlaneseq
          %v299 = vshrl.u32 %v298, 7
          %v300 = vsub.s32 0, %v299
          %v301 = vrot.slane %v296, %v300
          %v303 = vadd.f32 %v295, %v301
          %304 = vst [vmem:[#allocation2] sm:$0xff] %v303
        $region52: #{tpu_custom_call.1} parent=39 // pred_fallthru
          _
        %v305 = vld [vmem:[#allocation2] sm:$0xff]
        %v306 = vld [vmem:[#allocation6] sm:$0xff]
        %v307 = vld [vmem:[#allocation6 + $0x8] sm:$0xff]
        %v308 = vld [vmem:[#allocation6 + $0x10] sm:$0xff]
        %v309 = vld [vmem:[#allocation6 + $0x18] sm:$0xff]
        %v310 = vld [vmem:[#allocation6 + $0x20] sm:$0xff]
        %v311 = vld [vmem:[#allocation6 + $0x28] sm:$0xff]
        %v312 = vld [vmem:[#allocation6 + $0x30] sm:$0xff]
        %v313 = vld [vmem:[#allocation6 + $0x38] sm:$0xff]
        %v314 = vld [vmem:[#allocation6 + $0x40] sm:$0xff]
        %v315 = vld [vmem:[#allocation6 + $0x48] sm:$0xff]
        %v316 = vld [vmem:[#allocation6 + $0x50] sm:$0xff]
        %v317 = vld [vmem:[#allocation6 + $0x58] sm:$0xff]
        %v318 = vld [vmem:[#allocation6 + $0x60] sm:$0xff]
        %v319 = vld [vmem:[#allocation6 + $0x68] sm:$0xff]
        %v320 = vld [vmem:[#allocation6 + $0x70] sm:$0xff]
        %v321 = vld [vmem:[#allocation6 + $0x78] sm:$0xff]
        %v322 = vld [vmem:[%s4] sm:$0x1]
        %v324 = vlaneseq
        %v325 = vshrl.u32 %v324, 7
        %v326 = vsub.s32 0, %v325
        %v327 = vrot.slane %v322, %v326
        %329 = vmatprep.subr.mxu0 0.0
        %330 = vmatpush1.msra.mxu0 %v306
        %331 = vmatprep.subr.mxu0 0.0
        %332 = vmatpush1.msra.mxu0 %v307
        %333 = vmatprep.subr.mxu0 0.0
        %334 = vmatpush1.msra.mxu0 %v308
        %335 = vmatprep.subr.mxu0 0.0
        %336 = vmatpush1.msra.mxu0 %v309
        %337 = vmatprep.subr.mxu0 0.0
        %338 = vmatpush1.msra.mxu0 %v310
        %339 = vmatprep.subr.mxu0 0.0
        %340 = vmatpush1.msra.mxu0 %v311
        %341 = vmatprep.subr.mxu0 0.0
        %342 = vmatpush1.msra.mxu0 %v312
        %343 = vmatprep.subr.mxu0 0.0
        %344 = vmatpush1.msra.mxu0 %v313
        %345 = vmatprep.subr.mxu0 0.0
        %346 = vmatpush1.msra.mxu0 %v314
        %347 = vmatprep.subr.mxu0 0.0
        %348 = vmatpush1.msra.mxu0 %v315
        %349 = vmatprep.subr.mxu0 0.0
        %350 = vmatpush1.msra.mxu0 %v316
        %351 = vmatprep.subr.mxu0 0.0
        %352 = vmatpush1.msra.mxu0 %v317
        %353 = vmatprep.subr.mxu0 0.0
        %354 = vmatpush1.msra.mxu0 %v318
        %355 = vmatprep.subr.mxu0 0.0
        %356 = vmatpush1.msra.mxu0 %v319
        %357 = vmatprep.subr.mxu0 0.0
        %358 = vmatpush1.msra.mxu0 %v320
        %359 = vmatprep.subr.mxu0 0.0
        %360 = vmatpush1.msra.mxu0 %v321
        %361 = vmatprep.subr.mxu0 0.0
        %362 = vmatpush1.msra.mxu0 0.0
        %363 = vmatprep.subr.mxu0 0.0
        %364 = vmatpush1.msra.mxu0 0.0
        %365 = vmatprep.subr.mxu0 0.0
        %366 = vmatpush1.msra.mxu0 0.0
        %367 = vmatprep.subr.mxu0 0.0
        %368 = vmatpush1.msra.mxu0 0.0
        %369 = vmatprep.subr.mxu0 0.0
        %370 = vmatpush1.msra.mxu0 0.0
        %371 = vmatprep.subr.mxu0 0.0
        %372 = vmatpush1.msra.mxu0 0.0
        %373 = vmatprep.subr.mxu0 0.0
        %374 = vmatpush1.msra.mxu0 0.0
        %375 = vmatprep.subr.mxu0 0.0
        %376 = vmatpush1.msra.mxu0 0.0
        %377 = vmatprep.subr.mxu0 0.0
        %378 = vmatpush1.msra.mxu0 0.0
        %379 = vmatprep.subr.mxu0 0.0
        %380 = vmatpush1.msra.mxu0 0.0
        %381 = vmatprep.subr.mxu0 0.0
        %382 = vmatpush1.msra.mxu0 0.0
        %383 = vmatprep.subr.mxu0 0.0
        %384 = vmatpush1.msra.mxu0 0.0
        %385 = vmatprep.subr.mxu0 0.0
        %386 = vmatpush1.msra.mxu0 0.0
        %387 = vmatprep.subr.mxu0 0.0
        %388 = vmatpush1.msra.mxu0 0.0
        %389 = vmatprep.subr.mxu0 0.0
        %390 = vmatpush1.msra.mxu0 0.0
        %391 = vmatprep.subr.mxu0 0.0
        %392 = vmatpush1.msra.mxu0 0.0
        %393 = vmatprep.mubr.f32.mxu0 0.0
        %394 = vmatmul.mubr.f32.gmra.mrb[0].mxu0 %v305
        %v395 = vpop.f32.mrb[0].mxu0
        %v396 = vadd.f32 %v327, %v395
        %v397 = vpop.f32.mrb[0].mxu0
        %398 = vdwg.mxu0
        %v399 = vld [vmem:[%s238] sm:$0xff]
        %v400 = vadd.f32 %v399, %v396
        %401 = vst [vmem:[%s268] sm:$0xff] %v400
        %s402 = sand.u32 %s155, 1
        %s403 = scalar_lea.sflag [#allocation5], %s402
        %s404 = sand.u32 %s155, 1
        %s405 = smul.addr %s404, 8
        %s406 = scalar_lea.vmem [#allocation8], %s405
        // Predicated region
        $region53: #{tpu_custom_call.1} parent=39 // pred_check
          %p407 = pneg %p165
        $region54: #{tpu_custom_call.1} parent=39 // pred_check_branch
          %409 = sbr.rel (%p407) target = $region56
        $region55: #{tpu_custom_call.1} parent=39 // pred_region
          %s411 = ssub.s32 128, 128
          %412 = vsyncadd %s403, %s411
          %s413 = sadd.s32 %s28, %s27
          %s414 = smul.addr %s413, 128
          %s415 = scalar_lea.hbm %s5, %s414
          %s417 = sshll.u32 %s406, 4
          %s418 = int_to_ptr.vmem [resolvable:$true] %s417
          %420 = dma.vmem_to_hbm [thread:$0]  %s418, 128, %s415, %s403
        $region56: #{tpu_custom_call.1} parent=39 // pred_fallthru
          _
      $region40: #{tpu_custom_call.1} parent=5 // pred_fallthru
        _
      %p421 = scmp.le.s32.totalorder 2, %s18
      // Predicated region
      $region57: #{tpu_custom_call.1} parent=5 // pred_check
        %p422 = pneg %p421
      $region58: #{tpu_custom_call.1} parent=5 // pred_check_branch
        %424 = sbr.rel (%p422) target = $region60
      $region59: #{tpu_custom_call.1} parent=5 // pred_region
        %s425 = ssub.s32 %s18, 2
        // Predicated region
        $region61: #{tpu_custom_call.1} parent=59 // pred_check
          %p426 = pneg %p171
        $region62: #{tpu_custom_call.1} parent=59 // pred_check_branch
          %428 = sbr.rel (%p426) target = $region64
        $region63: #{tpu_custom_call.1} parent=59 // pred_region
          %s429 = sand.u32 %s156, 1
          %s430 = scalar_lea.sflag [#allocation5], %s429
          %s431 = sand.u32 %s156, 1
          %s432 = smul.addr %s431, 8
          %s433 = scalar_lea.vmem [#allocation8], %s432
          %434 = dma.done %s430, 128
        $region64: #{tpu_custom_call.1} parent=59 // pred_fallthru
          _
      $region60: #{tpu_custom_call.1} parent=5 // pred_fallthru
        _
    $region6: #{tpu_custom_call.1} parent=1 // loop_footer
      %s22 = sadd.s32 1, %s18
    $region7: #{tpu_custom_call.1} parent=1 // loop_footer_branch
      %17 = sbr.rel target = $region3
    $region8: #{tpu_custom_call.1} parent=1 // loop_exit
      _
    %435 = vsyncpa [#allocation4], 1
    %s436 = scalar_lea.sflag [#allocation4], 1
    %437 = vsyncpa %s436, 1
    %438 = vsyncpa [#allocation7], 1
    %439 = vsyncpa [#allocation5], 1
    %s440 = scalar_lea.sflag [#allocation5], 1
    %441 = vsyncpa %s440, 1

</llo_original>
